<compile_context>
chip_gen: v5e
topology: v5e:2x2
jax: 0.10.0
libtpu: 0.0.40
codegen_flags: <defaults>
</compile_context>

<pallas_src>
import math

import jax
import jax.numpy as jnp
from jax.experimental import pallas as pl
from jax.experimental.pallas import tpu as pltpu


def _crelu_kernel(x_ref, o_ref):
    # x_ref: (B, TR, LANE)        dense slab tile
    # o_ref: (B, 2, TR, LANE);    [:, 0] = relu(x), [:, 1] = relu(-x)
    v = x_ref[...]
    zero = jnp.zeros((), dtype=v.dtype)
    o_ref[:, 0, :, :] = jnp.maximum(v, zero)
    o_ref[:, 1, :, :] = jnp.maximum(-v, zero)


def _crelu_xla(x):
    # Fused XLA fallback (single elementwise pass): used for tiny activations
    # and for p % 128 != 0 shapes, where a Pallas pad+slice would double HBM
    # traffic.
    return jnp.maximum(jnp.concatenate([x, -x], axis=1), 0)


def crelu(x, *, lane_tile=512, target_block_bytes=4 * 1024 * 1024,
          min_pallas_bytes=256 * 1024, min_grid_steps=8):
    """CReLU forward. x: (N, C, H, W) -> (N, 2C, H, W)."""
    n, c, h, w = x.shape
    p = c * h * w
    itemsize = jnp.dtype(x.dtype).itemsize

    # Dispatch: tiny total bytes, or a lane remainder that would force a
    # wrapper pad (1x pass) + output slice (2x pass), -> fused XLA op.
    if n * p * itemsize < min_pallas_bytes or p % 128 != 0:
        return _crelu_xla(x)

    # Sublane multiple for the dtype (8 for f32, 16 for bf16, 32 for int8/fp8).
    sub = max(8, 32 // itemsize)

    # Lane width: the largest multiple of 128 that divides p and is <= lane_tile
    # -> the (N, R, LANE) slab is a free reshape, no padding anywhere.
    lane = 128 * math.gcd(p // 128, max(1, lane_tile // 128))
    r = p // lane                      # exact
    x_slab = x.reshape(n, r, lane)

    # --- block shaping -------------------------------------------------------
    # b_tile: whole batch elements per block (small-p / large-N regime), kept
    # small enough that the grid still has >= min_grid_steps steps.
    b_by_bytes = target_block_bytes // (p * itemsize)
    b_by_depth = n // min_grid_steps
    b_tile = max(1, min(b_by_bytes, b_by_depth, n))

    if b_tile > 1:
        # Case B: several whole elements per block; 1-D grid over batches.
        grid = (pl.cdiv(n, b_tile),)
        in_spec = pl.BlockSpec((b_tile, r, lane), lambda i: (i, 0, 0))
        out_spec = pl.BlockSpec((b_tile, 2, r, lane), lambda i: (i, 0, 0, 0))
        dims = ("parallel",)
        block_rows = b_tile * r
    else:
        # Case A: tile rows within each batch element.
        #   tr from the byte target, capped so the total grid keeps
        #   >= min_grid_steps steps (>= ceil(8/N) blocks per element).
        tr_bytes = (target_block_bytes // (lane * itemsize)) // sub * sub
        blocks_per_elem = pl.cdiv(min_grid_steps, n)
        tr_depth = (r // blocks_per_elem) // sub * sub
        tr = min(max(sub, min(tr_bytes, tr_depth)), r)
        grid = (n, pl.cdiv(r, tr))
        in_spec = pl.BlockSpec((1, tr, lane), lambda i, j: (i, j, 0))
        out_spec = pl.BlockSpec((1, 2, tr, lane), lambda i, j: (i, 0, j, 0))
        dims = ("parallel", "parallel")
        block_rows = tr

    # Scoped-VMEM budget: double-buffered input block + double-buffered 2x-sized
    # output block = 6 * input-block bytes, plus slack.  Stays well under v7x's
    # 64 MiB physical VMEM; v5e/v6e have 128 MiB physical.
    in_block_bytes = block_rows * lane * itemsize
    vmem_limit = int(min(max(6 * in_block_bytes + (2 << 20), 16 << 20), 48 << 20))

    out = pl.pallas_call(
        _crelu_kernel,
        out_shape=jax.ShapeDtypeStruct((n, 2, r, lane), x.dtype),
        grid=grid,
        in_specs=[in_spec],
        out_specs=out_spec,
        compiler_params=pltpu.CompilerParams(
            dimension_semantics=dims,
            vmem_limit_bytes=vmem_limit,
        ),
        cost_estimate=pl.CostEstimate(
            flops=3 * n * p,
            transcendentals=0,
            bytes_accessed=3 * n * p * itemsize,
        ),
    )(x_slab)

    # (N, 2, R, LANE) -> (N, 2C, H, W): contiguous reshape == channel concat.
    return out.reshape(n, 2 * c, h, w)


if __name__ == "__main__":
    key = jax.random.PRNGKey(0)
    k1, k2, k3, k4 = jax.random.split(key, 4)

    def ref(v):
        return jnp.maximum(jnp.concatenate([v, -v], axis=1), 0)

    # 1) Small NCHW demo shape; force the Pallas path (row-tiled, tr == r).
    x1 = jax.random.normal(k1, (2, 4, 16, 16), dtype=jnp.float32)
    y1 = jax.block_until_ready(crelu(x1, min_pallas_bytes=0))
    assert y1.shape == (2, 8, 16, 16), y1.shape
    assert jnp.allclose(y1, ref(x1)), "mismatch (pallas, row-tiled)"

    # 2) Auto-dispatch: tiny total bytes -> XLA fallback.
    y1f = jax.block_until_ready(crelu(x1))
    assert jnp.allclose(y1f, ref(x1)), "mismatch (fallback, tiny)"

    # 3) Row-tiled path with a partial (masked) last row block: r=9, tr=8.
    x2 = jax.random.normal(k2, (2, 8, 24, 24), dtype=jnp.float32)
    y2 = jax.block_until_ready(crelu(x2, min_pallas_bytes=0))
    assert y2.shape == (2, 16, 24, 24), y2.shape
    assert jnp.allclose(y2, ref(x2)), "mismatch (pallas, partial row block)"

    # 4) Batched-elements-per-block path (b_tile=2, grid depth 8).
    x3 = jax.random.normal(k3, (16, 4, 16, 16), dtype=jnp.float32)
    y3 = jax.block_until_ready(crelu(x3, min_pallas_bytes=0))
    assert y3.shape == (16, 8, 16, 16), y3.shape
    assert jnp.allclose(y3, ref(x3)), "mismatch (pallas, batched blocks)"

    # 5) Lane-remainder shape (C*H*W % 128 != 0) routes to the fused XLA op.
    x4 = jax.random.normal(k4, (2, 3, 14, 14), dtype=jnp.float32)
    y4 = jax.block_until_ready(crelu(x4, min_pallas_bytes=0))
    assert y4.shape == (2, 6, 14, 14), y4.shape
    assert jnp.allclose(y4, ref(x4)), "mismatch (fallback, remainder)"

    # 6) Default dispatch that actually takes the Pallas path (>= 256 KiB).
    x5 = jax.random.normal(k1, (2, 8, 64, 64), dtype=jnp.float32)
    y5 = jax.block_until_ready(crelu(x5))
    assert y5.shape == (2, 16, 64, 64), y5.shape
    assert jnp.allclose(y5, ref(x5)), "mismatch (pallas, default dispatch)"

    print("KERNEL_OK")
</pallas_src>

<mosaic_0001>
module attributes {stable_mosaic.version = 11 : i64} {
  func.func @_crelu_kernel(%arg0: i32, %arg1: i32, %arg2: memref<1x2x512xf32, #tpu.memory_space<vmem>>, %arg3: memref<1x2x2x512xf32, #tpu.memory_space<vmem>>) attributes {dimension_semantics = [#tpu.dimension_semantics<parallel>, #tpu.dimension_semantics<parallel>], iteration_bounds = array<i64: 2, 1>, scalar_prefetch = 0 : i64, scratch_operands = 0 : i64, tpu.core_type = #tpu.core_type<tc>, window_params = [{transform_indices = @transform_0, window_bounds = array<i64: 1, 2, 512>}, {transform_indices = @transform_1, window_bounds = array<i64: 1, 2, 2, 512>}]} {
    %c0 = arith.constant 0 : index
    %c0_0 = arith.constant 0 : index
    %c0_1 = arith.constant 0 : index
    %0 = vector.load %arg2[%c0, %c0_0, %c0_1] : memref<1x2x512xf32, #tpu.memory_space<vmem>>, vector<1x2x512xf32>
    %cst = arith.constant 0.000000e+00 : f32
    %1 = vector.broadcast %cst : f32 to vector<1x2x512xf32>
    %2 = arith.maximumf %0, %1 : vector<1x2x512xf32>
    %c0_2 = arith.constant 0 : index
    %c0_3 = arith.constant 0 : index
    %c0_4 = arith.constant 0 : index
    %c0_5 = arith.constant 0 : index
    %3 = vector.load %arg3[%c0_2, %c0_3, %c0_4, %c0_5] : memref<1x2x2x512xf32, #tpu.memory_space<vmem>>, vector<1x1x2x512xf32>
    %4 = vector.shape_cast %3 : vector<1x1x2x512xf32> to vector<1x2x512xf32>
    %5 = vector.shape_cast %2 : vector<1x2x512xf32> to vector<1x1x2x512xf32>
    tpu.vector_store %arg3[%c0_2, %c0_3, %c0_4, %c0_5], %5 {strides = array<i32>} : memref<1x2x2x512xf32, #tpu.memory_space<vmem>>, vector<1x1x2x512xf32>,
    %cst_6 = arith.constant 0.000000e+00 : f32
    %6 = vector.broadcast %cst_6 : f32 to vector<1x2x512xf32>
    %7 = arith.subf %6, %0 : vector<1x2x512xf32>
    %cst_7 = arith.constant 0.000000e+00 : f32
    %8 = vector.broadcast %cst_7 : f32 to vector<1x2x512xf32>
    %9 = arith.maximumf %7, %8 : vector<1x2x512xf32>
    %c0_8 = arith.constant 0 : index
    %c1 = arith.constant 1 : index
    %c0_9 = arith.constant 0 : index
    %c0_10 = arith.constant 0 : index
    %10 = vector.load %arg3[%c0_8, %c1, %c0_9, %c0_10] : memref<1x2x2x512xf32, #tpu.memory_space<vmem>>, vector<1x1x2x512xf32>
    %11 = vector.shape_cast %10 : vector<1x1x2x512xf32> to vector<1x2x512xf32>
    %12 = vector.shape_cast %9 : vector<1x2x512xf32> to vector<1x1x2x512xf32>
    tpu.vector_store %arg3[%c0_8, %c1, %c0_9, %c0_10], %12 {strides = array<i32>} : memref<1x2x2x512xf32, #tpu.memory_space<vmem>>, vector<1x1x2x512xf32>,
    return
  }
  func.func @transform_0(%arg0: i32, %arg1: i32) -> (i32, i32, i32) {
    %c0_i32 = arith.constant 0 : i32
    %c0_i32_0 = arith.constant 0 : i32
    return %arg0, %arg1, %c0_i32 : i32, i32, i32
  }
  func.func @transform_1(%arg0: i32, %arg1: i32) -> (i32, i32, i32, i32) {
    %c0_i32 = arith.constant 0 : i32
    %c0_i32_0 = arith.constant 0 : i32
    %c0_i32_1 = arith.constant 0 : i32
    return %arg0, %c0_i32, %arg1, %c0_i32_0 : i32, i32, i32, i32
  }
}

</mosaic_0001>

<llo_original>
// kernel: tpu_custom_call.1
$region0: #{tpu_custom_call.1}
  #allocation0 [shape = 'u32[]', space=smem, size = 0x4, offset = 0x4, fixed_abs, tag = 'smem constant byte address 0x4 - core index']
  #allocation1 [shape = 'u32[72,128]{1,0:T(1,128)}', space=vmem, size = 0x9000, scoped, tag = 'internal scratch']
  %s0 = inlined_call_operand.hbm [shape: f32[2,2,512], index: 0, kind: input, shape index: {}]
  %s1 = inlined_call_operand.hbm [shape: f32[2,2,2,512], index: 1, kind: output, shape index: {}]
  %s2 = sld [smem:[#allocation0]]
  $region41: #{tpu_custom_call.1} parent=0
    _
  %s4 = ssub.s32 1, %s2
  %s5 = scalar_select 0, %s4, %s2
  $region1: #{tpu_custom_call.1} parent=0
    #allocation2 [shape = 'u8[8192]{0}', space=vmem, size = 0x2000, scoped, tag = 'input window, operand 0']
    #allocation3 [shape = 's32[2]{0}', space=sflag, size = 0x8, scoped, tag = 'scoped memory for tpu_custom_call.1']
    #allocation4 [shape = 's32[2]{0}', space=sflag, size = 0x8, scoped, tag = 'scoped memory for tpu_custom_call.1']
    #allocation5 [shape = 'u8[16384]{0}', space=vmem, size = 0x4000, scoped, tag = 'output window, operand 0']
    %6 = vsyncpa [#allocation3], 0
    %s7 = scalar_lea.sflag [#allocation3], 1
    %8 = vsyncpa %s7, 0
    %9 = vsyncpa [#allocation4], 0
    %s10 = scalar_lea.sflag [#allocation4], 1
    %11 = vsyncpa %s10, 0
    loop: start=0, step=1, limit=4
    $region2: #{tpu_custom_call.1} parent=1 // loop_pre_header
      _
    $region3: #{tpu_custom_call.1} parent=1 // loop_header
      %s13 = sphi 0, %s17
      %p14 = scmp.ge.s32.totalorder %s13, 4
      %s20 = sphi 0, %s32
      %s21 = sphi 0, %s28
      %s22 = sphi 0, %s20
      %s23 = sphi 0, %s21
      %s24 = sphi 0, %s22
      %s25 = sphi 0, %s23
      %s37 = sphi 0, %s39
      %s40 = sphi 0, %s37
      %s41 = sphi 0, %s40
      %s57 = sphi 0, %s41
      %s65 = sphi 0, %s67
      %s68 = sphi 0, %s65
      %s69 = sphi 0, %s68
      %s85 = sphi 0, %s69
    $region4: #{tpu_custom_call.1} parent=1 // loop_header_branch
      %16 = sbr.rel (%p14) target = $region8
    $region5: #{tpu_custom_call.1} parent=1 // loop_body
      %s18 = ssub.s32 %s13, 1
      %s19 = ssub.s32 %s13, 2
      %s26 = sadd.s32 1, %s21
      %p27 = scmp.ge.s32.totalorder %s26, 1
      %s28 = scalar_select %p27, 0, %s26
      %s29 = sadd.s32 1, %s20
      %s30 = scalar_select %p27, %s29, %s20
      %p31 = scmp.ge.s32.totalorder %s30, 2
      %s32 = scalar_select %p31, 0, %s30
      %s33 = ssub.s32 %s20, %s32
      %s34 = ssub.s32 %s21, %s28
      %s35 = sor.u32 %s33, %s34
      %p36 = scmp.eq.s32.totalorder %s35, 0
      %s38 = sadd.s32 %s37, 1
      %s39 = scalar_select %p36, %s37, %s38
      %p42 = pneg %p36
      %p43 = scmp.eq.s32.totalorder %s13, 1
      %p44 = por %p42, %p43
      %p45 = scmp.ne.s32.totalorder %s37, %s40
      %p46 = scmp.eq.s32.totalorder %s13, 0
      %p47 = por %p45, %p46
      %p48 = scmp.ne.s32.totalorder %s37, %s40
      %p49 = scmp.eq.s32.totalorder %s18, 1
      %p50 = por %p48, %p49
      %p51 = scmp.ne.s32.totalorder %s40, %s41
      %p52 = scmp.eq.s32.totalorder %s18, 0
      %p53 = por %p51, %p52
      %p54 = scmp.ne.s32.totalorder %s40, %s41
      %p55 = scmp.eq.s32.totalorder %s19, 1
      %p56 = por %p54, %p55
      %p58 = scmp.ne.s32.totalorder %s41, %s57
      %p59 = scmp.eq.s32.totalorder %s19, 0
      %p60 = por %p58, %p59
      %s61 = ssub.s32 %s20, %s32
      %s62 = ssub.s32 %s21, %s28
      %s63 = sor.u32 %s61, %s62
      %p64 = scmp.eq.s32.totalorder %s63, 0
      %s66 = sadd.s32 %s65, 1
      %s67 = scalar_select %p64, %s65, %s66
      %p70 = pneg %p64
      %p71 = scmp.eq.s32.totalorder %s13, 1
      %p72 = por %p70, %p71
      %p73 = scmp.ne.s32.totalorder %s65, %s68
      %p74 = scmp.eq.s32.totalorder %s13, 0
      %p75 = por %p73, %p74
      %p76 = scmp.ne.s32.totalorder %s65, %s68
      %p77 = scmp.eq.s32.totalorder %s18, 1
      %p78 = por %p76, %p77
      %p79 = scmp.ne.s32.totalorder %s68, %s69
      %p80 = scmp.eq.s32.totalorder %s18, 0
      %p81 = por %p79, %p80
      %p82 = scmp.ne.s32.totalorder %s68, %s69
      %p83 = scmp.eq.s32.totalorder %s19, 1
      %p84 = por %p82, %p83
      %p86 = scmp.ne.s32.totalorder %s69, %s85
      %p87 = scmp.eq.s32.totalorder %s19, 0
      %p88 = por %p86, %p87
      %p89 = scmp.le.s32.totalorder 1, %s13
      %p90 = scmp.lt.s32.totalorder %s13, 3
      %p91 = pnand %p89, %p90
      %p92 = pneg %p91
      // Predicated region
      $region9: #{tpu_custom_call.1} parent=5 // pred_check
        _
      $region10: #{tpu_custom_call.1} parent=5 // pred_check_branch
        %94 = sbr.rel (%p91) target = $region12
      $region11: #{tpu_custom_call.1} parent=5 // pred_region
        %s95 = ssub.s32 %s13, 1
      $region12: #{tpu_custom_call.1} parent=5 // pred_fallthru
        _
      %p96 = scmp.lt.s32.totalorder %s13, 2
      // Predicated region
      $region13: #{tpu_custom_call.1} parent=5 // pred_check
        %p97 = pneg %p96
      $region14: #{tpu_custom_call.1} parent=5 // pred_check_branch
        %99 = sbr.rel (%p97) target = $region16
      $region15: #{tpu_custom_call.1} parent=5 // pred_region
        // Predicated region
        $region17: #{tpu_custom_call.1} parent=15 // pred_check
          %p100 = pneg %p47
        $region18: #{tpu_custom_call.1} parent=15 // pred_check_branch
          %102 = sbr.rel (%p100) target = $region20
        $region19: #{tpu_custom_call.1} parent=15 // pred_region
          %s103 = sand.u32 %s37, 1
          %s104 = scalar_lea.sflag [#allocation3], %s103
          %s105 = sand.u32 %s37, 1
          %s106 = smul.addr %s105, 8
          %s107 = scalar_lea.vmem [#allocation2], %s106
          %109 = vsyncadd %s104, 0
          %s110 = smul.addr %s21, 4
          %s111 = smul.addr %s20, 4
          %s112 = sadd.s32 %s110, %s111
          %s113 = smul.addr %s112, 2
          %s114 = scalar_lea.hbm %s0, %s113
          %s116 = sshll.u32 %s114, 4
          %s117 = int_to_ptr.hbm [resolvable:$true] %s116
          %s118 = sshll.u32 %s107, 4
          %s119 = int_to_ptr.vmem [resolvable:$true] %s118
          %121 = dma.hbm_to_vmem [thread:$0]  %s117, 128, %s119, %s104
        $region20: #{tpu_custom_call.1} parent=15 // pred_fallthru
          _
      $region16: #{tpu_custom_call.1} parent=5 // pred_fallthru
        _
      %p122 = scmp.le.s32.totalorder 1, %s13
      %p123 = scmp.lt.s32.totalorder %s13, 3
      %p124 = pnand %p122, %p123
      %p125 = pneg %p124
      // Predicated region
      $region21: #{tpu_custom_call.1} parent=5 // pred_check
        _
      $region22: #{tpu_custom_call.1} parent=5 // pred_check_branch
        %127 = sbr.rel (%p124) target = $region24
      $region23: #{tpu_custom_call.1} parent=5 // pred_region
        %s128 = ssub.s32 %s13, 1
        %s129 = sand.u32 %s40, 1
        %s130 = scalar_lea.sflag [#allocation3], %s129
        %s131 = sand.u32 %s40, 1
        %s132 = smul.addr %s131, 8
        %s133 = scalar_lea.vmem [#allocation2], %s132
        // Predicated region
        $region25: #{tpu_custom_call.1} parent=23 // pred_check
          %p134 = pneg %p53
        $region26: #{tpu_custom_call.1} parent=23 // pred_check_branch
          %136 = sbr.rel (%p134) target = $region28
        $region27: #{tpu_custom_call.1} parent=23 // pred_region
          %138 = dma.done %s130, 128
        $region28: #{tpu_custom_call.1} parent=23 // pred_fallthru
          _
        %s139 = sand.u32 %s40, 1
        %s140 = scalar_lea.sflag [#allocation3], %s139
        %s141 = sand.u32 %s40, 1
        %s142 = smul.addr %s141, 8
        %s143 = scalar_lea.vmem [#allocation2], %s142
        %p144 = pneg %p53
        %p145 = pneg %p50
        %p146 = pneg %p81
        %p147 = pneg %p78
        %s148 = sand.u32 %s68, 1
        %s149 = scalar_lea.sflag [#allocation4], %s148
        %s150 = sand.u32 %s68, 1
        %s151 = smul.addr %s150, 16
        %s152 = scalar_lea.vmem [#allocation5], %s151
        %v153 = vld [vmem:[%s133] sm:$0xff]
        %v154 = vmax.f32 %v153, 0.0
        %155 = vst [vmem:[%s152] sm:$0xff] %v154
        %v156 = vsub.f32 0.0, %v153
        %v157 = vmax.f32 %v156, 0.0
        %s158 = scalar_lea.vmem %s152, 8 [#allocation5]
        %159 = vst [vmem:[%s158] sm:$0xff] %v157
        %s160 = sand.u32 %s68, 1
        %s161 = scalar_lea.sflag [#allocation4], %s160
        %s162 = sand.u32 %s68, 1
        %s163 = smul.addr %s162, 16
        %s164 = scalar_lea.vmem [#allocation5], %s163
        // Predicated region
        $region29: #{tpu_custom_call.1} parent=23 // pred_check
          %p165 = pneg %p78
        $region30: #{tpu_custom_call.1} parent=23 // pred_check_branch
          %167 = sbr.rel (%p165) target = $region32
        $region31: #{tpu_custom_call.1} parent=23 // pred_region
          %169 = vsyncadd %s161, 0
          %s170 = smul.addr %s23, 4
          %s171 = smul.addr %s22, 8
          %s172 = sadd.s32 %s170, %s171
          %s173 = smul.addr %s172, 2
          %s174 = scalar_lea.hbm %s1, %s173
          %s175 = sshll.u32 %s164, 4
          %s176 = int_to_ptr.vmem [resolvable:$true] %s175
          %s177 = sshll.u32 %s174, 4
          %s178 = int_to_ptr.hbm [resolvable:$true] %s177
          %183 = dma.vmem_to_hbm [thread:$0]  %s176, 256, %s178, %s161, 128, 128, 8
        $region32: #{tpu_custom_call.1} parent=23 // pred_fallthru
          _
      $region24: #{tpu_custom_call.1} parent=5 // pred_fallthru
        _
      %p184 = scmp.le.s32.totalorder 2, %s13
      // Predicated region
      $region33: #{tpu_custom_call.1} parent=5 // pred_check
        %p185 = pneg %p184
      $region34: #{tpu_custom_call.1} parent=5 // pred_check_branch
        %187 = sbr.rel (%p185) target = $region36
      $region35: #{tpu_custom_call.1} parent=5 // pred_region
        %s188 = ssub.s32 %s13, 2
        // Predicated region
        $region37: #{tpu_custom_call.1} parent=35 // pred_check
          %p189 = pneg %p84
        $region38: #{tpu_custom_call.1} parent=35 // pred_check_branch
          %191 = sbr.rel (%p189) target = $region40
        $region39: #{tpu_custom_call.1} parent=35 // pred_region
          %s192 = sand.u32 %s69, 1
          %s193 = scalar_lea.sflag [#allocation4], %s192
          %s194 = sand.u32 %s69, 1
          %s195 = smul.addr %s194, 16
          %s196 = scalar_lea.vmem [#allocation5], %s195
          %198 = dma.done %s193, 256
        $region40: #{tpu_custom_call.1} parent=35 // pred_fallthru
          _
      $region36: #{tpu_custom_call.1} parent=5 // pred_fallthru
        _
    $region6: #{tpu_custom_call.1} parent=1 // loop_footer
      %s17 = sadd.s32 1, %s13
    $region7: #{tpu_custom_call.1} parent=1 // loop_footer_branch
      %12 = sbr.rel target = $region3
    $region8: #{tpu_custom_call.1} parent=1 // loop_exit
      _
    %199 = vsyncpa [#allocation3], 1
    %s200 = scalar_lea.sflag [#allocation3], 1
    %201 = vsyncpa %s200, 1
    %202 = vsyncpa [#allocation4], 1
    %s203 = scalar_lea.sflag [#allocation4], 1
    %204 = vsyncpa %s203, 1

</llo_original>
